<compile_context>
chip_gen: v6e
topology: v6e:2x2x1
jax: 0.10.0
libtpu: 0.0.40
codegen_flags: <defaults>
</compile_context>

<pallas_src>
import functools

import jax
import jax.numpy as jnp
from jax.experimental import pallas as pl
from jax.experimental.pallas import tpu as pltpu

LANE = 128                            # lane width: action axis padded to a multiple of this
TB_MAX = 2048                         # hard cap on batch-tile rows
VMEM_TILE_BUDGET = 24 * 1024 * 1024   # conservative tile budget (fits v7x's 32 MiB scoped default)


def _round_up(x, m):
    return (x + m - 1) // m * m


def dueling_dqn_kernel(x_ref, w1_ref, b1_ref, w2_ref, b2_ref, out_ref, *, mean_col):
    # Fused first layer for both streams: one MXU pass -> [tb, 2H], f32 accumulate.
    x = x_ref[...].astype(w1_ref.dtype)       # no-op for f32; bf16 path drives the bf16 MXU
    h = jnp.dot(x, w1_ref[...], preferred_element_type=jnp.float32) + b1_ref[...]
    h = jnp.maximum(h, 0.0)

    # Fused second layer: columns [0, n_actions) hold adv, column `mean_col` holds
    # (value - mean(adv)); remaining padded columns are zero.  One MXU pass, no slices.
    s = jnp.dot(h.astype(w2_ref.dtype), w2_ref[...],
                preferred_element_type=jnp.float32) + b2_ref[...]

    # Dueling combine: Q = adv + (value - mean(adv)).  The broadcast-add also touches
    # the reserved / padded columns, which the caller slices off.
    out_ref[...] = (s + s[:, mean_col:mean_col + 1]).astype(out_ref.dtype)


def prepare_params(params, n_actions, weights_dtype=jnp.float32):
    """One-time re-layout of PyTorch-style params ([out, in]) into kernel layout.

    Folds the value stream and the advantage mean into the fused second-layer weight
    so the kernel needs no slicing and no cross-lane reductions.
    """
    hidden_size, inp_size = params["adv_w1"].shape
    n_pad = _round_up(n_actions + 1, LANE)     # lane-dense output width
    mean_col = n_actions                       # reserved column: value - mean(adv)
    inv_n = 1.0 / n_actions

    # Fused first layer: [INP, 2H] (adv stream first, value stream second).
    w1 = jnp.concatenate([params["adv_w1"].T, params["val_w1"].T], axis=1)
    b1 = jnp.concatenate([params["adv_b1"], params["val_b1"]])[None, :]

    # Fused second layer: [2H, n_pad].
    adv_w2_t = params["adv_w2"].T              # [H, n_actions]
    w2 = jnp.zeros((2 * hidden_size, n_pad), jnp.float32)
    w2 = w2.at[:hidden_size, :n_actions].set(adv_w2_t)
    w2 = w2.at[:hidden_size, mean_col].set(-inv_n * jnp.sum(adv_w2_t, axis=1))
    w2 = w2.at[hidden_size:, mean_col].set(params["val_w2"][0])
    b2 = jnp.zeros((1, n_pad), jnp.float32)
    b2 = b2.at[0, :n_actions].set(params["adv_b2"])
    b2 = b2.at[0, mean_col].set(params["val_b2"][0] - inv_n * jnp.sum(params["adv_b2"]))

    # Weights may be stored narrow (bf16 for the v6e/v7x MXU); biases stay f32.
    w1 = w1.astype(weights_dtype)
    w2 = w2.astype(weights_dtype)

    return dict(w1=w1, b1=b1, w2=w2, b2=b2,
                hidden_size=int(hidden_size), inp_size=int(inp_size),
                n_actions=int(n_actions), n_pad=int(n_pad), mean_col=int(mean_col))


def _choose_batch_tile(batch, x_row_bytes, out_row_bytes, weight_bytes):
    """Batch tile: multiple of 8, VMEM-budgeted, >= 2 grid steps when possible."""
    per_row = 2 * (x_row_bytes + out_row_bytes)          # x / out tiles are double-buffered
    budget = max(VMEM_TILE_BUDGET - 2 * weight_bytes, 8 * per_row)
    cap = max(8, min(TB_MAX, (budget // per_row) // 8 * 8))
    if batch > cap:
        return int(cap)
    # >= 2 grid steps so dimension_semantics=("parallel",) can shard the batch axis
    # across both TensorCores on megacore parts (v7x); tb == batch is the full-block case.
    tb = _round_up(pl.cdiv(batch, 2), 8)
    return int(tb) if tb < batch else int(batch)


def dueling_dqn_head(x, prep):
    """x: [B, inp_size]. prep: output of prepare_params(). Returns Q-values [B, n_actions]."""
    B, inp = x.shape
    H = prep["hidden_size"]
    n_actions = prep["n_actions"]
    n_pad = prep["n_pad"]
    assert inp == prep["inp_size"], (inp, prep["inp_size"])

    w1, b1, w2, b2 = prep["w1"], prep["b1"], prep["w2"], prep["b2"]
    weight_bytes = w1.nbytes + b1.nbytes + w2.nbytes + b2.nbytes

    out_itemsize = x.dtype.itemsize
    tb = _choose_batch_tile(B, inp * x.dtype.itemsize, n_pad * out_itemsize, weight_bytes)
    grid = (pl.cdiv(B, tb),)          # last tile may be partial: no wrapper pad of x

    const = lambda i: (0, 0)

    def resident(shape):
        # Grid-invariant weights: keep a single VMEM buffer instead of the default two.
        return pl.BlockSpec(shape, const, pipeline_mode=pl.Buffered(1))

    kernel = functools.partial(dueling_dqn_kernel, mean_col=prep["mean_col"])

    flops = 2 * B * (inp * 2 * H + 2 * H * n_pad)
    bytes_accessed = x.nbytes + weight_bytes + B * n_pad * out_itemsize
    vmem_limit = int(min(64 * 1024 * 1024,
                         max(16 * 1024 * 1024,
                             2 * weight_bytes
                             + 2 * tb * (inp * x.dtype.itemsize + n_pad * out_itemsize)
                             + 8 * 1024 * 1024)))

    out = pl.pallas_call(
        kernel,
        out_shape=jax.ShapeDtypeStruct((B, n_pad), x.dtype),
        grid=grid,
        in_specs=[
            pl.BlockSpec((tb, inp), lambda i: (i, 0)),   # x tile (double-buffered)
            resident((inp, 2 * H)),                      # fused W1
            resident((1, 2 * H)),                        # fused b1
            resident((2 * H, n_pad)),                    # fused W2 (adv + value/mean column)
            resident((1, n_pad)),                        # fused b2
        ],
        out_specs=pl.BlockSpec((tb, n_pad), lambda i: (i, 0)),
        compiler_params=pltpu.CompilerParams(
            dimension_semantics=("parallel",),           # shard batch across TCs (v7x)
            vmem_limit_bytes=vmem_limit),
        cost_estimate=pl.CostEstimate(flops=flops, transcendentals=0,
                                      bytes_accessed=bytes_accessed),
    )(x, w1, b1, w2, b2)

    # Lane-dense [B, n_pad] store; real Q-values are the first n_actions lanes.
    # (For greedy-action DQN inference, fusing the per-row max/argmax into the kernel
    # would remove this slice and shrink output HBM traffic ~16x.)
    return out[:, :n_actions]


def init_params(key, inp_size, hidden_size, n_actions):
    """Deterministic init, mimicking nn.Linear's U(-1/sqrt(fan_in), 1/sqrt(fan_in))."""
    ks = jax.random.split(key, 8)

    def lin(kw, kb, fan_in, fan_out):
        bound = 1.0 / jnp.sqrt(jnp.float32(fan_in))
        w = jax.random.uniform(kw, (fan_out, fan_in), jnp.float32, -bound, bound)
        b = jax.random.uniform(kb, (fan_out,), jnp.float32, -bound, bound)
        return w, b

    adv_w1, adv_b1 = lin(ks[0], ks[1], inp_size, hidden_size)
    adv_w2, adv_b2 = lin(ks[2], ks[3], hidden_size, n_actions)
    val_w1, val_b1 = lin(ks[4], ks[5], inp_size, hidden_size)
    val_w2, val_b2 = lin(ks[6], ks[7], hidden_size, 1)
    return dict(adv_w1=adv_w1, adv_b1=adv_b1, adv_w2=adv_w2, adv_b2=adv_b2,
                val_w1=val_w1, val_b1=val_b1, val_w2=val_w2, val_b2=val_b2)


def reference(x, p):
    """Pure-JAX reference matching the PyTorch forward."""
    h_a = jnp.maximum(x @ p["adv_w1"].T + p["adv_b1"], 0.0)
    adv = h_a @ p["adv_w2"].T + p["adv_b2"]
    h_v = jnp.maximum(x @ p["val_w1"].T + p["val_b1"], 0.0)
    val = h_v @ p["val_w2"].T + p["val_b2"]
    return val + (adv - adv.mean(axis=1, keepdims=True))


if __name__ == "__main__":
    INP, HID, N_ACT = 32, 32, 8

    key = jax.random.PRNGKey(0)
    k_x, k_x2, k_p = jax.random.split(key, 3)
    params = init_params(k_p, INP, HID, N_ACT)

    # --- f32 weights, single full batch tile --------------------------------
    x = jax.random.normal(k_x, (8, INP), jnp.float32)
    prep = prepare_params(params, N_ACT)               # one-time weight re-layout
    q = jax.block_until_ready(dueling_dqn_head(x, prep))
    q_ref = reference(x, params)
    assert q.shape == (8, N_ACT), q.shape
    assert jnp.allclose(q, q_ref, atol=1e-5, rtol=1e-5), float(jnp.max(jnp.abs(q - q_ref)))

    # --- f32 weights, multi-step grid with a partial last batch tile --------
    x2 = jax.random.normal(k_x2, (20, INP), jnp.float32)
    q2 = jax.block_until_ready(dueling_dqn_head(x2, prep))
    q2_ref = reference(x2, params)
    assert q2.shape == (20, N_ACT), q2.shape
    assert jnp.allclose(q2, q2_ref, atol=1e-5, rtol=1e-5), float(jnp.max(jnp.abs(q2 - q2_ref)))

    # --- bf16-stored weights (v6e/v7x bf16 MXU path); looser tolerance ------
    prep_bf16 = prepare_params(params, N_ACT, weights_dtype=jnp.bfloat16)
    q3 = jax.block_until_ready(dueling_dqn_head(x, prep_bf16))
    assert q3.shape == (8, N_ACT), q3.shape
    assert jnp.allclose(q3, q_ref, atol=1e-1, rtol=1e-1), float(jnp.max(jnp.abs(q3 - q_ref)))

    print("KERNEL_OK")
</pallas_src>

<mosaic_0001>
module attributes {stable_mosaic.version = 11 : i64} {
  func.func @dueling_dqn_kernel(%arg0: i32, %arg1: memref<8x32xf32, #tpu.memory_space<vmem>>, %arg2: memref<32x64xf32, #tpu.memory_space<vmem>>, %arg3: memref<1x64xf32, #tpu.memory_space<vmem>>, %arg4: memref<64x128xf32, #tpu.memory_space<vmem>>, %arg5: memref<1x128xf32, #tpu.memory_space<vmem>>, %arg6: memref<8x128xf32, #tpu.memory_space<vmem>>) attributes {dimension_semantics = [#tpu.dimension_semantics<parallel>], iteration_bounds = array<i64: 1>, scalar_prefetch = 0 : i64, scratch_operands = 0 : i64, tpu.core_type = #tpu.core_type<tc>, window_params = [{transform_indices = @transform_0, window_bounds = array<i64: 8, 32>}, {pipeline_mode = #tpu.pipeline_mode<synchronous>, transform_indices = @transform_1, window_bounds = array<i64: 32, 64>}, {pipeline_mode = #tpu.pipeline_mode<synchronous>, transform_indices = @transform_2, window_bounds = array<i64: 1, 64>}, {pipeline_mode = #tpu.pipeline_mode<synchronous>, transform_indices = @transform_3, window_bounds = array<i64: 64, 128>}, {pipeline_mode = #tpu.pipeline_mode<synchronous>, transform_indices = @transform_4, window_bounds = array<i64: 1, 128>}, {transform_indices = @transform_5, window_bounds = array<i64: 8, 128>}]} {
    %c0 = arith.constant 0 : index
    %c0_0 = arith.constant 0 : index
    %0 = vector.load %arg1[%c0, %c0_0] : memref<8x32xf32, #tpu.memory_space<vmem>>, vector<8x32xf32>
    %c0_1 = arith.constant 0 : index
    %c0_2 = arith.constant 0 : index
    %1 = vector.load %arg2[%c0_1, %c0_2] : memref<32x64xf32, #tpu.memory_space<vmem>>, vector<32x64xf32>
    %cst = arith.constant dense<0.000000e+00> : vector<8x64xf32>
    %2 = tpu.matmul %0, %1, %cst {dimension_numbers = #tpu.dot_dimension_numbers<[1], [0], [0], [1], [0, 0, 1, 1], [], []>} : vector<8x32xf32>, vector<32x64xf32>, vector<8x64xf32> -> vector<8x64xf32>
    %c0_3 = arith.constant 0 : index
    %c0_4 = arith.constant 0 : index
    %3 = vector.load %arg3[%c0_3, %c0_4] : memref<1x64xf32, #tpu.memory_space<vmem>>, vector<1x64xf32>
    %4 = vector.broadcast %3 : vector<1x64xf32> to vector<8x64xf32>
    %5 = arith.addf %2, %4 : vector<8x64xf32>
    %cst_5 = arith.constant 0.000000e+00 : f32
    %6 = vector.broadcast %cst_5 : f32 to vector<8x64xf32>
    %7 = arith.maximumf %5, %6 : vector<8x64xf32>
    %c0_6 = arith.constant 0 : index
    %c0_7 = arith.constant 0 : index
    %8 = vector.load %arg4[%c0_6, %c0_7] : memref<64x128xf32, #tpu.memory_space<vmem>>, vector<64x128xf32>
    %cst_8 = arith.constant dense<0.000000e+00> : vector<8x128xf32>
    %9 = tpu.matmul %7, %8, %cst_8 {dimension_numbers = #tpu.dot_dimension_numbers<[1], [0], [0], [1], [0, 0, 1, 1], [], []>} : vector<8x64xf32>, vector<64x128xf32>, vector<8x128xf32> -> vector<8x128xf32>
    %c0_9 = arith.constant 0 : index
    %c0_10 = arith.constant 0 : index
    %10 = vector.load %arg5[%c0_9, %c0_10] : memref<1x128xf32, #tpu.memory_space<vmem>>, vector<1x128xf32>
    %11 = vector.broadcast %10 : vector<1x128xf32> to vector<8x128xf32>
    %12 = arith.addf %9, %11 : vector<8x128xf32>
    %13 = vector.extract_strided_slice %12 {offsets = [0, 8], sizes = [8, 1], strides = [1, 1]} : vector<8x128xf32> to vector<8x1xf32>
    %14 = vector.broadcast %13 : vector<8x1xf32> to vector<8x128xf32>
    %15 = arith.addf %12, %14 : vector<8x128xf32>
    %c0_11 = arith.constant 0 : index
    %c0_12 = arith.constant 0 : index
    %16 = vector.load %arg6[%c0_11, %c0_12] : memref<8x128xf32, #tpu.memory_space<vmem>>, vector<8x128xf32>
    tpu.vector_store %arg6[%c0_11, %c0_12], %15 {strides = array<i32>} : memref<8x128xf32, #tpu.memory_space<vmem>>, vector<8x128xf32>,
    return
  }
  func.func @transform_0(%arg0: i32) -> (i32, i32) {
    %c0_i32 = arith.constant 0 : i32
    %c0_i32_0 = arith.constant 0 : i32
    return %arg0, %c0_i32 : i32, i32
  }
  func.func @transform_1(%arg0: i32) -> (i32, i32) {
    %c0_i32 = arith.constant 0 : i32
    %c0_i32_0 = arith.constant 0 : i32
    %c0_i32_1 = arith.constant 0 : i32
    return %c0_i32, %c0_i32_0 : i32, i32
  }
  func.func @transform_2(%arg0: i32) -> (i32, i32) {
    %c0_i32 = arith.constant 0 : i32
    %c0_i32_0 = arith.constant 0 : i32
    %c0_i32_1 = arith.constant 0 : i32
    return %c0_i32, %c0_i32_0 : i32, i32
  }
  func.func @transform_3(%arg0: i32) -> (i32, i32) {
    %c0_i32 = arith.constant 0 : i32
    %c0_i32_0 = arith.constant 0 : i32
    %c0_i32_1 = arith.constant 0 : i32
    return %c0_i32, %c0_i32_0 : i32, i32
  }
  func.func @transform_4(%arg0: i32) -> (i32, i32) {
    %c0_i32 = arith.constant 0 : i32
    %c0_i32_0 = arith.constant 0 : i32
    %c0_i32_1 = arith.constant 0 : i32
    return %c0_i32, %c0_i32_0 : i32, i32
  }
  func.func @transform_5(%arg0: i32) -> (i32, i32) {
    %c0_i32 = arith.constant 0 : i32
    %c0_i32_0 = arith.constant 0 : i32
    return %arg0, %c0_i32 : i32, i32
  }
}

</mosaic_0001>

<llo_original>
// kernel: tpu_custom_call.1
$region0: #{tpu_custom_call.1}
  #allocation0 [shape = 'u32[]', space=smem, size = 0x4, offset = 0x4, fixed_abs, tag = 'smem constant byte address 0x4 - core index']
  #allocation1 [shape = 'u32[144,128]{1,0:T(1,128)}', space=vmem, size = 0x12000, scoped, tag = 'internal scratch']
  %s0 = inlined_call_operand.hbm [shape: f32[8,32], index: 0, kind: input, shape index: {}]
  %s1 = inlined_call_operand.hbm [shape: f32[32,64], index: 1, kind: input, shape index: {}]
  %s2 = inlined_call_operand.vmem [shape: f32[1,64], index: 2, kind: input, shape index: {}]
  %s3 = inlined_call_operand.hbm [shape: f32[64,128], index: 3, kind: input, shape index: {}]
  %s4 = inlined_call_operand.vmem [shape: f32[1,128], index: 4, kind: input, shape index: {}]
  %s5 = inlined_call_operand.hbm [shape: f32[8,128], index: 5, kind: output, shape index: {}]
  %s6 = sld [smem:[#allocation0]]
  $region42: #{tpu_custom_call.1} parent=0
    _
  %s8 = ssub.s32 1, %s6
  %s9 = scalar_select 0, %s8, %s6
  $region1: #{tpu_custom_call.1} parent=0
    #allocation2 [shape = 'u8[4096]{0}', space=vmem, size = 0x1000, scoped, tag = 'input window, operand 0, single buffered']
    #allocation3 [shape = 's32[1]{0}', space=sflag, size = 0x4, scoped, tag = 'scoped memory for tpu_custom_call.1']
    #allocation4 [shape = 's32[1]{0}', space=sflag, size = 0x4, scoped, tag = 'scoped memory for tpu_custom_call.1']
    #allocation5 [shape = 'u8[16384]{0}', space=vmem, size = 0x4000, scoped, tag = 'input window, operand 1, single buffered']
    #allocation6 [shape = 's32[1]{0}', space=sflag, size = 0x4, scoped, tag = 'scoped memory for tpu_custom_call.1']
    #allocation7 [shape = 'u8[32768]{0}', space=vmem, size = 0x8000, scoped, tag = 'input window, operand 3, single buffered']
    #allocation8 [shape = 'u8[4096]{0}', space=vmem, size = 0x1000, scoped, tag = 'output window, operand 0, single buffered']
    %10 = vsyncpa [#allocation3], 0
    %11 = vsyncpa [#allocation6], 0
    %12 = vsyncpa [#allocation4], 0
    // Predicated region
    $region2: #{tpu_custom_call.1} parent=1 // pred_check
      _
    $region3: #{tpu_custom_call.1} parent=1 // pred_check_branch
      %14 = sbr.rel (0) target = $region5
    $region4: #{tpu_custom_call.1} parent=1 // pred_region
      %s16 = ssub.s32 128, 128
      %17 = vsyncadd [#allocation3], %s16
      %s19 = sshll.u32 [#allocation2], 4
      %s20 = int_to_ptr.vmem [resolvable:$true] %s19
      %22 = dma.hbm_to_vmem [thread:$0]  %s0, 128, %s20, [#allocation3]
    $region5: #{tpu_custom_call.1} parent=1 // pred_fallthru
      _
    // Predicated region
    $region6: #{tpu_custom_call.1} parent=1 // pred_check
      _
    $region7: #{tpu_custom_call.1} parent=1 // pred_check_branch
      %24 = sbr.rel (0) target = $region9
    $region8: #{tpu_custom_call.1} parent=1 // pred_region
      %s26 = ssub.s32 512, 512
      %27 = vsyncadd [#allocation6], %s26
      %s28 = sshll.u32 [#allocation5], 4
      %s29 = int_to_ptr.vmem [resolvable:$true] %s28
      %34 = dma.hbm_to_vmem [thread:$0]  %s1, 512, %s29, [#allocation6], 128, 128, 8
    $region9: #{tpu_custom_call.1} parent=1 // pred_fallthru
      _
    // Predicated region
    $region10: #{tpu_custom_call.1} parent=1 // pred_check
      _
    $region11: #{tpu_custom_call.1} parent=1 // pred_check_branch
      %36 = sbr.rel (0) target = $region13
    $region12: #{tpu_custom_call.1} parent=1 // pred_region
      _
    $region13: #{tpu_custom_call.1} parent=1 // pred_fallthru
      _
    // Predicated region
    $region14: #{tpu_custom_call.1} parent=1 // pred_check
      _
    $region15: #{tpu_custom_call.1} parent=1 // pred_check_branch
      %38 = sbr.rel (0) target = $region17
    $region16: #{tpu_custom_call.1} parent=1 // pred_region
      %s40 = ssub.s32 1024, 1024
      %41 = vsyncadd [#allocation6], %s40
      %s42 = sshll.u32 [#allocation7], 4
      %s43 = int_to_ptr.vmem [resolvable:$true] %s42
      %48 = dma.hbm_to_vmem [thread:$0]  %s3, 1024, %s43, [#allocation6], 128, 128, 8
    $region17: #{tpu_custom_call.1} parent=1 // pred_fallthru
      _
    // Predicated region
    $region18: #{tpu_custom_call.1} parent=1 // pred_check
      _
    $region19: #{tpu_custom_call.1} parent=1 // pred_check_branch
      %50 = sbr.rel (0) target = $region21
    $region20: #{tpu_custom_call.1} parent=1 // pred_region
      _
    $region21: #{tpu_custom_call.1} parent=1 // pred_fallthru
      _
    // Predicated region
    $region22: #{tpu_custom_call.1} parent=1 // pred_check
      _
    $region23: #{tpu_custom_call.1} parent=1 // pred_check_branch
      %52 = sbr.rel (0) target = $region25
    $region24: #{tpu_custom_call.1} parent=1 // pred_region
      %53 = dma.done [#allocation3], 128
    $region25: #{tpu_custom_call.1} parent=1 // pred_fallthru
      _
    // Predicated region
    $region26: #{tpu_custom_call.1} parent=1 // pred_check
      _
    $region27: #{tpu_custom_call.1} parent=1 // pred_check_branch
      %55 = sbr.rel (0) target = $region29
    $region28: #{tpu_custom_call.1} parent=1 // pred_region
      %56 = dma.done [#allocation6], 512
    $region29: #{tpu_custom_call.1} parent=1 // pred_fallthru
      _
    // Predicated region
    $region30: #{tpu_custom_call.1} parent=1 // pred_check
      _
    $region31: #{tpu_custom_call.1} parent=1 // pred_check_branch
      %58 = sbr.rel (0) target = $region33
    $region32: #{tpu_custom_call.1} parent=1 // pred_region
      %59 = dma.done [#allocation6], 1024
    $region33: #{tpu_custom_call.1} parent=1 // pred_fallthru
      _
    %v60 = vld [vmem:[#allocation2] sm:$0xff]
    %v61 = vld [vmem:[#allocation5] sm:$0xff]
    %v62 = vld [vmem:[#allocation5 + $0x8] sm:$0xff]
    %v63 = vld [vmem:[#allocation5 + $0x10] sm:$0xff]
    %v64 = vld [vmem:[#allocation5 + $0x18] sm:$0xff]
    %v65 = vld [vmem:[%s2] sm:$0x1]
    %v67 = vlaneseq
    %v68 = vshrl.u32 %v67, 7
    %v69 = vsub.s32 0, %v68
    %v70 = vrot.slane %v65, %v69
    %vm72 = vcmask 261120
    %v74 = vsel %vm72, %v60, 0
    %76 = vmatprep.subr.mxu0 0.0
    %77 = vmatpush1.msra.mxu0 0.0
    %78 = vmatprep.subr.mxu0 0.0
    %79 = vmatpush1.msra.mxu0 0.0
    %80 = vmatprep.subr.mxu0 0.0
    %81 = vmatpush1.msra.mxu0 0.0
    %82 = vmatprep.subr.mxu0 0.0
    %83 = vmatpush1.msra.mxu0 0.0
    %84 = vmatprep.subr.mxu0 0.0
    %85 = vmatpush1.msra.mxu0 0.0
    %86 = vmatprep.subr.mxu0 0.0
    %87 = vmatpush1.msra.mxu0 0.0
    %88 = vmatprep.subr.mxu0 0.0
    %89 = vmatpush1.msra.mxu0 0.0
    %90 = vmatprep.subr.mxu0 0.0
    %91 = vmatpush1.msra.mxu0 0.0
    %92 = vmatprep.subr.mxu0 0.0
    %93 = vmatpush1.msra.mxu0 0.0
    %94 = vmatprep.subr.mxu0 0.0
    %95 = vmatpush1.msra.mxu0 0.0
    %96 = vmatprep.subr.mxu0 0.0
    %97 = vmatpush1.msra.mxu0 0.0
    %98 = vmatprep.subr.mxu0 0.0
    %99 = vmatpush1.msra.mxu0 0.0
    %100 = vmatprep.subr.mxu0 0.0
    %101 = vmatpush1.msra.mxu0 %v64
    %102 = vmatprep.subr.mxu0 0.0
    %103 = vmatpush1.msra.mxu0 %v63
    %104 = vmatprep.subr.mxu0 0.0
    %105 = vmatpush1.msra.mxu0 %v62
    %106 = vmatprep.subr.mxu0 0.0
    %107 = vmatpush1.msra.mxu0 %v61
    %108 = vmatprep.subr.mxu0 0.0
    %109 = vmatpush2.msra.mxu0 0.0
    %110 = vmatprep.subr.mxu0 0.0
    %111 = vmatpush2.msra.mxu0 0.0
    %112 = vmatprep.subr.mxu0 0.0
    %113 = vmatpush2.msra.mxu0 0.0
    %114 = vmatprep.subr.mxu0 0.0
    %115 = vmatpush2.msra.mxu0 0.0
    %116 = vmatprep.subr.mxu0 0.0
    %117 = vmatpush2.msra.mxu0 0.0
    %118 = vmatprep.subr.mxu0 0.0
    %119 = vmatpush2.msra.mxu0 0.0
    %120 = vmatprep.subr.mxu0 0.0
    %121 = vmatpush2.msra.mxu0 0.0
    %122 = vmatprep.subr.mxu0 0.0
    %123 = vmatpush2.msra.mxu0 0.0
    %124 = vmatprep.subr.mxu0 0.0
    %125 = vmatpush2.msra.mxu0 0.0
    %126 = vmatprep.subr.mxu0 0.0
    %127 = vmatpush2.msra.mxu0 0.0
    %128 = vmatprep.subr.mxu0 0.0
    %129 = vmatpush2.msra.mxu0 0.0
    %130 = vmatprep.subr.mxu0 0.0
    %131 = vmatpush2.msra.mxu0 0.0
    %132 = vmatprep.subr.mxu0 0.0
    %133 = vmatpush2.msra.mxu0 0.0
    %134 = vmatprep.subr.mxu0 0.0
    %135 = vmatpush2.msra.mxu0 0.0
    %136 = vmatprep.subr.mxu0 0.0
    %137 = vmatpush2.msra.mxu0 0.0
    %138 = vmatprep.subr.mxu0 0.0
    %139 = vmatpush2.msra.mxu0 0.0
    %140 = vmatprep.mubr.f32.mxu0 0.0
    %141 = vmatmul.mubr.f32.gmra.mxu0 %v74
    %v142 = vpop.f32.mrf.mxu0
    %v143 = vadd.f32 %v70, %v142
    %v144 = vpop.f32.mrf.mxu0
    %145 = vdwg.mxu0
    %v146 = vmax.f32 %v143, 0.0
    %v147 = vld [vmem:[#allocation7] sm:$0xff]
    %v148 = vld [vmem:[#allocation7 + $0x8] sm:$0xff]
    %v149 = vld [vmem:[#allocation7 + $0x10] sm:$0xff]
    %v150 = vld [vmem:[#allocation7 + $0x18] sm:$0xff]
    %v151 = vld [vmem:[#allocation7 + $0x20] sm:$0xff]
    %v152 = vld [vmem:[#allocation7 + $0x28] sm:$0xff]
    %v153 = vld [vmem:[#allocation7 + $0x30] sm:$0xff]
    %v154 = vld [vmem:[#allocation7 + $0x38] sm:$0xff]
    %v155 = vld [vmem:[%s4] sm:$0x1]
    %v157 = vlaneseq
    %v158 = vshrl.u32 %v157, 7
    %v159 = vsub.s32 0, %v158
    %v160 = vrot.slane %v155, %v159
    %vm162 = vcmask 523264
    %v164 = vsel %vm162, %v146, 0
    %166 = vmatprep.subr.mxu0 0.0
    %167 = vmatpush1.msra.mxu0 0.0
    %168 = vmatprep.subr.mxu0 0.0
    %169 = vmatpush1.msra.mxu0 0.0
    %170 = vmatprep.subr.mxu0 0.0
    %171 = vmatpush1.msra.mxu0 0.0
    %172 = vmatprep.subr.mxu0 0.0
    %173 = vmatpush1.msra.mxu0 0.0
    %174 = vmatprep.subr.mxu0 0.0
    %175 = vmatpush1.msra.mxu0 0.0
    %176 = vmatprep.subr.mxu0 0.0
    %177 = vmatpush1.msra.mxu0 0.0
    %178 = vmatprep.subr.mxu0 0.0
    %179 = vmatpush1.msra.mxu0 0.0
    %180 = vmatprep.subr.mxu0 0.0
    %181 = vmatpush1.msra.mxu0 0.0
    %182 = vmatprep.subr.mxu0 0.0
    %183 = vmatpush1.msra.mxu0 %v154
    %184 = vmatprep.subr.mxu0 0.0
    %185 = vmatpush1.msra.mxu0 %v153
    %186 = vmatprep.subr.mxu0 0.0
    %187 = vmatpush1.msra.mxu0 %v152
    %188 = vmatprep.subr.mxu0 0.0
    %189 = vmatpush1.msra.mxu0 %v151
    %190 = vmatprep.subr.mxu0 0.0
    %191 = vmatpush1.msra.mxu0 %v150
    %192 = vmatprep.subr.mxu0 0.0
    %193 = vmatpush1.msra.mxu0 %v149
    %194 = vmatprep.subr.mxu0 0.0
    %195 = vmatpush1.msra.mxu0 %v148
    %196 = vmatprep.subr.mxu0 0.0
    %197 = vmatpush1.msra.mxu0 %v147
    %198 = vmatprep.subr.mxu0 0.0
    %199 = vmatpush2.msra.mxu0 0.0
    %200 = vmatprep.subr.mxu0 0.0
    %201 = vmatpush2.msra.mxu0 0.0
    %202 = vmatprep.subr.mxu0 0.0
    %203 = vmatpush2.msra.mxu0 0.0
    %204 = vmatprep.subr.mxu0 0.0
    %205 = vmatpush2.msra.mxu0 0.0
    %206 = vmatprep.subr.mxu0 0.0
    %207 = vmatpush2.msra.mxu0 0.0
    %208 = vmatprep.subr.mxu0 0.0
    %209 = vmatpush2.msra.mxu0 0.0
    %210 = vmatprep.subr.mxu0 0.0
    %211 = vmatpush2.msra.mxu0 0.0
    %212 = vmatprep.subr.mxu0 0.0
    %213 = vmatpush2.msra.mxu0 0.0
    %214 = vmatprep.subr.mxu0 0.0
    %215 = vmatpush2.msra.mxu0 0.0
    %216 = vmatprep.subr.mxu0 0.0
    %217 = vmatpush2.msra.mxu0 0.0
    %218 = vmatprep.subr.mxu0 0.0
    %219 = vmatpush2.msra.mxu0 0.0
    %220 = vmatprep.subr.mxu0 0.0
    %221 = vmatpush2.msra.mxu0 0.0
    %222 = vmatprep.subr.mxu0 0.0
    %223 = vmatpush2.msra.mxu0 0.0
    %224 = vmatprep.subr.mxu0 0.0
    %225 = vmatpush2.msra.mxu0 0.0
    %226 = vmatprep.subr.mxu0 0.0
    %227 = vmatpush2.msra.mxu0 0.0
    %228 = vmatprep.subr.mxu0 0.0
    %229 = vmatpush2.msra.mxu0 0.0
    %230 = vmatprep.mubr.f32.mxu0 0.0
    %231 = vmatmul.mubr.f32.gmra.mxu0 %v164
    %v232 = vpop.f32.mrf.mxu0
    %v233 = vadd.f32 %v160, %v232
    %v234 = vpop.f32.mrf.mxu0
    %235 = vdwg.mxu0
    %237 = vset.pattern.permute.xlu0 8
    %238 = vperm.xlu0 %237, %v233
    %v239 = vpop.permute.xlu0 %238
    %v241 = vadd.f32 %v233, %v239
    %242 = vst [vmem:[#allocation8] sm:$0xff] %v241
    // Predicated region
    $region34: #{tpu_custom_call.1} parent=1 // pred_check
      _
    $region35: #{tpu_custom_call.1} parent=1 // pred_check_branch
      %244 = sbr.rel (0) target = $region37
    $region36: #{tpu_custom_call.1} parent=1 // pred_region
      %s246 = ssub.s32 128, 128
      %247 = vsyncadd [#allocation4], %s246
      %s249 = sshll.u32 [#allocation8], 4
      %s250 = int_to_ptr.vmem [resolvable:$true] %s249
      %252 = dma.vmem_to_hbm [thread:$0]  %s250, 128, %s5, [#allocation4]
    $region37: #{tpu_custom_call.1} parent=1 // pred_fallthru
      _
    // Predicated region
    $region38: #{tpu_custom_call.1} parent=1 // pred_check
      _
    $region39: #{tpu_custom_call.1} parent=1 // pred_check_branch
      %254 = sbr.rel (0) target = $region41
    $region40: #{tpu_custom_call.1} parent=1 // pred_region
      %255 = dma.done [#allocation4], 128
    $region41: #{tpu_custom_call.1} parent=1 // pred_fallthru
      _
    %256 = vsyncpa [#allocation3], 1
    %257 = vsyncpa [#allocation6], 1
    %258 = vsyncpa [#allocation4], 1

</llo_original>
